<compile_context>
chip_gen: v7x
topology: tpu7x:2x2x1
jax: 0.10.0
libtpu: 0.0.40
codegen_flags: <defaults>
</compile_context>

<pallas_src>
import functools

import jax
import jax.numpy as jnp
from jax.experimental import pallas as pl
from jax.experimental.pallas import tpu as pltpu


INPUT_SIZE = 27
HIDDEN_SIZE = 64
OUTPUT_SIZE = 9

_LANE = 128          # TPU lane width: batch tiles are multiples of this
_MAX_TILE_B = 8192   # rows per grid step; ~3.5 MiB VMEM incl. double buffers


def policy_kernel(xt_ref, w1t_ref, b1_ref, w2t_ref, b2_ref, out_ref):
    """One batch tile of the fused MLP + softmax, feature-major layout.

    Per-grid-step shapes:
      xt_ref  : (F, TB)  boards, batch on lanes (lane-dense loads)
      w1t_ref : (H, F)   first-layer weight^T   (grid-invariant, VMEM-resident)
      b1_ref  : (H, 1)
      w2t_ref : (O, H)   second-layer weight^T
      b2_ref  : (O, 1)
      out_ref : (O, TB)  softmax probs, batch on lanes (lane-dense stores)
    """
    # Cast up: also accepts bf16 / int8 boards (values {0,1}); all accumulate
    # and elementwise math stays f32.
    xt = xt_ref[...].astype(jnp.float32)

    # Hidden layer: (H, F) @ (F, TB) -> (H, TB) on the MXU, f32 accumulate.
    h = jnp.dot(w1t_ref[...], xt, preferred_element_type=jnp.float32) + b1_ref[...]
    h = jnp.maximum(h, 0.0)

    # Output layer: (O, H) @ (H, TB) -> (O, TB).
    logits = jnp.dot(w2t_ref[...], h, preferred_element_type=jnp.float32) + b2_ref[...]

    # Numerically stable softmax over the class axis (axis 0 = sublanes; the
    # 9-way cross-sublane reduce rides the XLU slot, exp rides the EUP slot).
    m = jnp.max(logits, axis=0, keepdims=True)
    e = jnp.exp(logits - m)
    denom = jnp.sum(e, axis=0, keepdims=True)
    # EUP reciprocal instead of a per-lane VPU divide; approx=False keeps the
    # sum(probs)==1 check within 1e-5.
    out_ref[...] = e * pl.reciprocal(denom, approx=False)


def _round_up(n, m):
    return ((n + m - 1) // m) * m


@functools.partial(jax.jit, static_argnames=("max_tile_b",))
def policy_forward(x, w1, b1, w2, b2, *, max_tile_b=_MAX_TILE_B):
    """Policy forward pass.

    x : (B, 27);  w1: (27, 64), b1: (1, 64), w2: (64, 9), b2: (1, 9)
    (weights stored as (in, out), i.e. torch weight.T). Returns (B, 9) f32.
    """
    B, F = x.shape
    H = w1.shape[1]
    O = w2.shape[1]

    # Batch tiling: lane-multiple tiles, 1-D grid over the batch axis.
    tile_b = min(max_tile_b, _round_up(B, _LANE))
    b_pad = _round_up(B, tile_b)
    grid = (b_pad // tile_b,)

    # Layout plumbing (wrapper side): batch on lanes, classes/features on
    # sublanes.  XLA fuses the pad + transpose into a single relayout pass.
    xt = jnp.pad(x, ((0, b_pad - B), (0, 0))).T      # (F, B_pad)
    w1t = w1.T                                        # (H, F)
    w2t = w2.T                                        # (O, H)
    b1c = b1.reshape(H, 1)
    b2c = b2.reshape(O, 1)

    cost = pl.CostEstimate(
        flops=2 * b_pad * (F * H + H * O),
        transcendentals=b_pad * (O + 1),              # exp + reciprocal
        bytes_accessed=(xt.size * xt.dtype.itemsize   # x in
                        + 4 * b_pad * O               # probs out
                        + 4 * (w1t.size + w2t.size + H + O)),  # weights/bias
    )

    out_t = pl.pallas_call(
        policy_kernel,
        out_shape=jax.ShapeDtypeStruct((O, b_pad), jnp.float32),
        grid=grid,
        in_specs=[
            pl.BlockSpec((F, tile_b), lambda i: (0, i)),   # x tile (streamed)
            pl.BlockSpec((H, F), lambda i: (0, 0)),        # weights: fetched once,
            pl.BlockSpec((H, 1), lambda i: (0, 0)),        # stay VMEM-resident
            pl.BlockSpec((O, H), lambda i: (0, 0)),
            pl.BlockSpec((O, 1), lambda i: (0, 0)),
        ],
        out_specs=pl.BlockSpec((O, tile_b), lambda i: (0, i)),
        compiler_params=pltpu.CompilerParams(
            dimension_semantics=("parallel",),             # v7x: shard batch over 2 TCs
        ),
        cost_estimate=cost,
    )(xt, w1t, b1c, w2t, b2c)

    return out_t.T[:B]                                     # back to (B, 9)


def init_params(key, input_size=INPUT_SIZE, hidden_size=HIDDEN_SIZE,
                output_size=OUTPUT_SIZE):
    """Deterministic init mimicking nn.Linear's U(-1/sqrt(fan_in), 1/sqrt(fan_in))."""
    k1, k2, k3, k4 = jax.random.split(key, 4)
    bound1 = 1.0 / (input_size ** 0.5)
    bound2 = 1.0 / (hidden_size ** 0.5)
    # Stored as (in, out): equivalent to torch's weight.T
    w1 = jax.random.uniform(k1, (input_size, hidden_size), jnp.float32, -bound1, bound1)
    b1 = jax.random.uniform(k2, (1, hidden_size), jnp.float32, -bound1, bound1)
    w2 = jax.random.uniform(k3, (hidden_size, output_size), jnp.float32, -bound2, bound2)
    b2 = jax.random.uniform(k4, (1, output_size), jnp.float32, -bound2, bound2)
    return w1, b1, w2, b2


if __name__ == "__main__":
    key = jax.random.PRNGKey(0)
    kx, kp = jax.random.split(key)

    batch = 8
    # Tic-tac-toe one-hot-ish board encoding; values in {0, 1} like the env.
    x = (jax.random.uniform(kx, (batch, INPUT_SIZE)) > 0.5).astype(jnp.float32)

    w1, b1, w2, b2 = init_params(kp)

    out = policy_forward(x, w1, b1, w2, b2)
    out = jax.block_until_ready(out)

    # Reference check in plain JAX (same math as the PyTorch module).
    h_ref = jnp.maximum(x @ w1 + b1, 0.0)
    logits_ref = h_ref @ w2 + b2
    ref = jax.nn.softmax(logits_ref, axis=1)

    assert out.shape == (batch, OUTPUT_SIZE)
    assert jnp.allclose(out, ref, atol=1e-5, rtol=1e-5)
    assert jnp.allclose(jnp.sum(out, axis=1), 1.0, atol=1e-5)

    print("KERNEL_OK")
</pallas_src>

<mosaic_0001>
module attributes {stable_mosaic.version = 11 : i64} {
  func.func @policy_kernel(%arg0: i32, %arg1: memref<27x128xf32, #tpu.memory_space<vmem>>, %arg2: memref<64x27xf32, #tpu.memory_space<vmem>>, %arg3: memref<64x1xf32, #tpu.memory_space<vmem>>, %arg4: memref<9x64xf32, #tpu.memory_space<vmem>>, %arg5: memref<9x1xf32, #tpu.memory_space<vmem>>, %arg6: memref<9x128xf32, #tpu.memory_space<vmem>>) attributes {dimension_semantics = [#tpu.dimension_semantics<parallel>], iteration_bounds = array<i64: 1>, scalar_prefetch = 0 : i64, scratch_operands = 0 : i64, tpu.core_type = #tpu.core_type<tc>, window_params = [{transform_indices = @transform_0, window_bounds = array<i64: 27, 128>}, {pipeline_mode = #tpu.pipeline_mode<synchronous>, transform_indices = @transform_1, window_bounds = array<i64: 64, 27>}, {pipeline_mode = #tpu.pipeline_mode<synchronous>, transform_indices = @transform_2, window_bounds = array<i64: 64, 1>}, {pipeline_mode = #tpu.pipeline_mode<synchronous>, transform_indices = @transform_3, window_bounds = array<i64: 9, 64>}, {pipeline_mode = #tpu.pipeline_mode<synchronous>, transform_indices = @transform_4, window_bounds = array<i64: 9, 1>}, {transform_indices = @transform_5, window_bounds = array<i64: 9, 128>}]} {
    %c0 = arith.constant 0 : index
    %c0_0 = arith.constant 0 : index
    %0 = vector.load %arg1[%c0, %c0_0] : memref<27x128xf32, #tpu.memory_space<vmem>>, vector<27x128xf32>
    %c0_1 = arith.constant 0 : index
    %c0_2 = arith.constant 0 : index
    %1 = vector.load %arg2[%c0_1, %c0_2] : memref<64x27xf32, #tpu.memory_space<vmem>>, vector<64x27xf32>
    %cst = arith.constant dense<0.000000e+00> : vector<64x128xf32>
    %2 = tpu.matmul %1, %0, %cst {dimension_numbers = #tpu.dot_dimension_numbers<[1], [0], [0], [1], [0, 0, 1, 1], [], []>} : vector<64x27xf32>, vector<27x128xf32>, vector<64x128xf32> -> vector<64x128xf32>
    %c0_3 = arith.constant 0 : index
    %c0_4 = arith.constant 0 : index
    %3 = vector.load %arg3[%c0_3, %c0_4] : memref<64x1xf32, #tpu.memory_space<vmem>>, vector<64x1xf32>
    %4 = vector.broadcast %3 : vector<64x1xf32> to vector<64x128xf32>
    %5 = arith.addf %2, %4 : vector<64x128xf32>
    %cst_5 = arith.constant 0.000000e+00 : f32
    %6 = vector.broadcast %cst_5 : f32 to vector<64x128xf32>
    %7 = arith.maximumf %5, %6 : vector<64x128xf32>
    %c0_6 = arith.constant 0 : index
    %c0_7 = arith.constant 0 : index
    %8 = vector.load %arg4[%c0_6, %c0_7] : memref<9x64xf32, #tpu.memory_space<vmem>>, vector<9x64xf32>
    %cst_8 = arith.constant dense<0.000000e+00> : vector<9x128xf32>
    %9 = tpu.matmul %8, %7, %cst_8 {dimension_numbers = #tpu.dot_dimension_numbers<[1], [0], [0], [1], [0, 0, 1, 1], [], []>} : vector<9x64xf32>, vector<64x128xf32>, vector<9x128xf32> -> vector<9x128xf32>
    %c0_9 = arith.constant 0 : index
    %c0_10 = arith.constant 0 : index
    %10 = vector.load %arg5[%c0_9, %c0_10] : memref<9x1xf32, #tpu.memory_space<vmem>>, vector<9x1xf32>
    %11 = vector.broadcast %10 : vector<9x1xf32> to vector<9x128xf32>
    %12 = arith.addf %9, %11 : vector<9x128xf32>
    %cst_11 = arith.constant dense<0xFF800000> : vector<128xf32>
    %13 = vector.multi_reduction <maximumf>, %12, %cst_11 [0] : vector<9x128xf32> to vector<128xf32>
    %14 = vector.shape_cast %13 : vector<128xf32> to vector<1x128xf32>
    %15 = vector.broadcast %14 : vector<1x128xf32> to vector<9x128xf32>
    %16 = arith.subf %12, %15 : vector<9x128xf32>
    %17 = math.exp %16 : vector<9x128xf32>
    %cst_12 = arith.constant dense<0.000000e+00> : vector<128xf32>
    %18 = vector.multi_reduction <add>, %17, %cst_12 [0] : vector<9x128xf32> to vector<128xf32>
    %19 = vector.shape_cast %18 : vector<128xf32> to vector<1x128xf32>
    %20 = tpu.reciprocal %19 : vector<1x128xf32> -> vector<1x128xf32>
    %21 = vector.broadcast %20 : vector<1x128xf32> to vector<9x128xf32>
    %22 = arith.mulf %17, %21 : vector<9x128xf32>
    %c0_13 = arith.constant 0 : index
    %c0_14 = arith.constant 0 : index
    %23 = vector.load %arg6[%c0_13, %c0_14] : memref<9x128xf32, #tpu.memory_space<vmem>>, vector<9x128xf32>
    tpu.vector_store %arg6[%c0_13, %c0_14], %22 {strides = array<i32>} : memref<9x128xf32, #tpu.memory_space<vmem>>, vector<9x128xf32>,
    return
  }
  func.func @transform_0(%arg0: i32) -> (i32, i32) {
    %c0_i32 = arith.constant 0 : i32
    %c0_i32_0 = arith.constant 0 : i32
    return %c0_i32, %arg0 : i32, i32
  }
  func.func @transform_1(%arg0: i32) -> (i32, i32) {
    %c0_i32 = arith.constant 0 : i32
    %c0_i32_0 = arith.constant 0 : i32
    %c0_i32_1 = arith.constant 0 : i32
    return %c0_i32, %c0_i32_0 : i32, i32
  }
  func.func @transform_2(%arg0: i32) -> (i32, i32) {
    %c0_i32 = arith.constant 0 : i32
    %c0_i32_0 = arith.constant 0 : i32
    %c0_i32_1 = arith.constant 0 : i32
    return %c0_i32, %c0_i32_0 : i32, i32
  }
  func.func @transform_3(%arg0: i32) -> (i32, i32) {
    %c0_i32 = arith.constant 0 : i32
    %c0_i32_0 = arith.constant 0 : i32
    %c0_i32_1 = arith.constant 0 : i32
    return %c0_i32, %c0_i32_0 : i32, i32
  }
  func.func @transform_4(%arg0: i32) -> (i32, i32) {
    %c0_i32 = arith.constant 0 : i32
    %c0_i32_0 = arith.constant 0 : i32
    %c0_i32_1 = arith.constant 0 : i32
    return %c0_i32, %c0_i32_0 : i32, i32
  }
  func.func @transform_5(%arg0: i32) -> (i32, i32) {
    %c0_i32 = arith.constant 0 : i32
    %c0_i32_0 = arith.constant 0 : i32
    return %c0_i32, %arg0 : i32, i32
  }
}

</mosaic_0001>

<llo_original>
// kernel: policy_forward.1
$region0: #{policy_forward.1}
  #allocation0 [shape = 'u32[]', space=smem, size = 0x4, offset = 0x4, fixed_abs, tag = 'smem constant byte address 0x4 - core index']
  #allocation1 [shape = 'u32[144,128]{1,0:T(1,128)}', space=vmem, size = 0x12000, scoped, tag = 'internal scratch']
  %s0 = inlined_call_operand.vmem [shape: f32[27,128], index: 0, kind: input, shape index: {}]
  %s1 = inlined_call_operand.vmem [shape: f32[64,27], index: 1, kind: input, shape index: {}]
  %s2 = inlined_call_operand.vmem [shape: f32[64,1], index: 2, kind: input, shape index: {}]
  %s3 = inlined_call_operand.vmem [shape: f32[9,64], index: 3, kind: input, shape index: {}]
  %s4 = inlined_call_operand.vmem [shape: f32[9,1], index: 4, kind: input, shape index: {}]
  %s5 = inlined_call_operand.vmem [shape: f32[9,128], index: 5, kind: output, shape index: {}]
  %s6 = sld [smem:[#allocation0]]
  $region30: #{policy_forward.1} parent=0
    _
  %s8 = ssub.s32 1, %s6
  %s9 = scalar_select 0, %s8, %s6
  // Predicated region
  $region2: #{policy_forward.1} parent=0 // pred_check
    _
  $region3: #{policy_forward.1} parent=0 // pred_check_branch
    %11 = sbr.rel (0) target = $region5
  $region4: #{policy_forward.1} parent=0 // pred_region
    _
  $region5: #{policy_forward.1} parent=0 // pred_fallthru
    _
  // Predicated region
  $region6: #{policy_forward.1} parent=0 // pred_check
    _
  $region7: #{policy_forward.1} parent=0 // pred_check_branch
    %13 = sbr.rel (0) target = $region9
  $region8: #{policy_forward.1} parent=0 // pred_region
    _
  $region9: #{policy_forward.1} parent=0 // pred_fallthru
    _
  // Predicated region
  $region10: #{policy_forward.1} parent=0 // pred_check
    _
  $region11: #{policy_forward.1} parent=0 // pred_check_branch
    %15 = sbr.rel (0) target = $region13
  $region12: #{policy_forward.1} parent=0 // pred_region
    _
  $region13: #{policy_forward.1} parent=0 // pred_fallthru
    _
  // Predicated region
  $region14: #{policy_forward.1} parent=0 // pred_check
    _
  $region15: #{policy_forward.1} parent=0 // pred_check_branch
    %17 = sbr.rel (0) target = $region17
  $region16: #{policy_forward.1} parent=0 // pred_region
    _
  $region17: #{policy_forward.1} parent=0 // pred_fallthru
    _
  // Predicated region
  $region18: #{policy_forward.1} parent=0 // pred_check
    _
  $region19: #{policy_forward.1} parent=0 // pred_check_branch
    %19 = sbr.rel (0) target = $region21
  $region20: #{policy_forward.1} parent=0 // pred_region
    _
  $region21: #{policy_forward.1} parent=0 // pred_fallthru
    _
  %v20 = vld [vmem:[%s0] sm:$0xff]
  %v21 = vld [vmem:[%s0 + $0x8] sm:$0xff]
  %v22 = vld [vmem:[%s0 + $0x10] sm:$0xff]
  %v23 = vld [vmem:[%s0 + $0x18] sm:$0x7]
  %v24 = vld [vmem:[%s1] sm:$0xff]
  %v25 = vld [vmem:[%s1 + $0x8] sm:$0xff]
  %v26 = vld [vmem:[%s1 + $0x10] sm:$0xff]
  %v27 = vld [vmem:[%s1 + $0x18] sm:$0xff]
  %v28 = vld [vmem:[%s1 + $0x20] sm:$0xff]
  %v29 = vld [vmem:[%s1 + $0x28] sm:$0xff]
  %v30 = vld [vmem:[%s1 + $0x30] sm:$0xff]
  %v31 = vld [vmem:[%s1 + $0x38] sm:$0xff]
  %v32 = vld [vmem:[%s2] sm:$0xff]
  %v33 = vld [vmem:[%s2 + $0x8] sm:$0xff]
  %v34 = vld [vmem:[%s2 + $0x10] sm:$0xff]
  %v35 = vld [vmem:[%s2 + $0x18] sm:$0xff]
  %v36 = vld [vmem:[%s2 + $0x20] sm:$0xff]
  %v37 = vld [vmem:[%s2 + $0x28] sm:$0xff]
  %v38 = vld [vmem:[%s2 + $0x30] sm:$0xff]
  %v39 = vld [vmem:[%s2 + $0x38] sm:$0xff]
  %41 = vset.pattern.permute.xlu0 0
  %42 = vperm.xlu0 %41, %v32
  %v43 = vpop.permute.xlu0 %42
  %46 = vset.pattern.permute.xlu0 0
  %47 = vperm.xlu0 %46, %v33
  %v48 = vpop.permute.xlu0 %47
  %51 = vset.pattern.permute.xlu0 0
  %52 = vperm.xlu0 %51, %v34
  %v53 = vpop.permute.xlu0 %52
  %56 = vset.pattern.permute.xlu0 0
  %57 = vperm.xlu0 %56, %v35
  %v58 = vpop.permute.xlu0 %57
  %61 = vset.pattern.permute.xlu0 0
  %62 = vperm.xlu0 %61, %v36
  %v63 = vpop.permute.xlu0 %62
  %66 = vset.pattern.permute.xlu0 0
  %67 = vperm.xlu0 %66, %v37
  %v68 = vpop.permute.xlu0 %67
  %71 = vset.pattern.permute.xlu0 0
  %72 = vperm.xlu0 %71, %v38
  %v73 = vpop.permute.xlu0 %72
  %76 = vset.pattern.permute.xlu0 0
  %77 = vperm.xlu0 %76, %v39
  %v78 = vpop.permute.xlu0 %77
  %vm80 = vcmask 220160
  %v82 = vsel %vm80, %v24, 0
  %v85 = vsel %vm80, %v25, 0
  %v88 = vsel %vm80, %v26, 0
  %v91 = vsel %vm80, %v27, 0
  %v94 = vsel %vm80, %v28, 0
  %v97 = vsel %vm80, %v29, 0
  %v100 = vsel %vm80, %v30, 0
  %v103 = vsel %vm80, %v31, 0
  %vm105 = vcmask 1042432
  %v107 = vsel %vm105, %v23, 0
  %109 = vmatprep.subr.mxu0 0.0
  %110 = vmatpush1.msra.mxu0 %v20
  %111 = vmatprep.subr.mxu0 0.0
  %112 = vmatpush1.msra.mxu0 %v21
  %113 = vmatprep.subr.mxu0 0.0
  %114 = vmatpush1.msra.mxu0 %v22
  %115 = vmatprep.subr.mxu0 0.0
  %116 = vmatpush1.msra.mxu0 %v107
  %117 = vmatprep.subr.mxu0 0.0
  %118 = vmatpush1.msra.mxu0 0.0
  %119 = vmatprep.subr.mxu0 0.0
  %120 = vmatpush1.msra.mxu0 0.0
  %121 = vmatprep.subr.mxu0 0.0
  %122 = vmatpush1.msra.mxu0 0.0
  %123 = vmatprep.subr.mxu0 0.0
  %124 = vmatpush1.msra.mxu0 0.0
  %125 = vmatprep.subr.mxu0 0.0
  %126 = vmatpush1.msra.mxu0 0.0
  %127 = vmatprep.subr.mxu0 0.0
  %128 = vmatpush1.msra.mxu0 0.0
  %129 = vmatprep.subr.mxu0 0.0
  %130 = vmatpush1.msra.mxu0 0.0
  %131 = vmatprep.subr.mxu0 0.0
  %132 = vmatpush1.msra.mxu0 0.0
  %133 = vmatprep.subr.mxu0 0.0
  %134 = vmatpush1.msra.mxu0 0.0
  %135 = vmatprep.subr.mxu0 0.0
  %136 = vmatpush1.msra.mxu0 0.0
  %137 = vmatprep.subr.mxu0 0.0
  %138 = vmatpush1.msra.mxu0 0.0
  %139 = vmatprep.subr.mxu0 0.0
  %140 = vmatpush1.msra.mxu0 0.0
  %141 = vmatprep.subr.mxu0 0.0
  %142 = vmatpush1.msra.mxu0 0.0
  %143 = vmatprep.subr.mxu0 0.0
  %144 = vmatpush1.msra.mxu0 0.0
  %145 = vmatprep.subr.mxu0 0.0
  %146 = vmatpush1.msra.mxu0 0.0
  %147 = vmatprep.subr.mxu0 0.0
  %148 = vmatpush1.msra.mxu0 0.0
  %149 = vmatprep.subr.mxu0 0.0
  %150 = vmatpush1.msra.mxu0 0.0
  %151 = vmatprep.subr.mxu0 0.0
  %152 = vmatpush1.msra.mxu0 0.0
  %153 = vmatprep.subr.mxu0 0.0
  %154 = vmatpush1.msra.mxu0 0.0
  %155 = vmatprep.subr.mxu0 0.0
  %156 = vmatpush1.msra.mxu0 0.0
  %157 = vmatprep.subr.mxu0 0.0
  %158 = vmatpush1.msra.mxu0 0.0
  %159 = vmatprep.subr.mxu0 0.0
  %160 = vmatpush1.msra.mxu0 0.0
  %161 = vmatprep.subr.mxu0 0.0
  %162 = vmatpush1.msra.mxu0 0.0
  %163 = vmatprep.subr.mxu0 0.0
  %164 = vmatpush1.msra.mxu0 0.0
  %165 = vmatprep.subr.mxu0 0.0
  %166 = vmatpush1.msra.mxu0 0.0
  %167 = vmatprep.subr.mxu0 0.0
  %168 = vmatpush1.msra.mxu0 0.0
  %169 = vmatprep.subr.mxu0 0.0
  %170 = vmatpush1.msra.mxu0 0.0
  %171 = vmatprep.subr.mxu0 0.0
  %172 = vmatpush1.msra.mxu0 0.0
  %173 = vmatprep.mubr.f32.mxu0 0.0
  %174 = vmatmul.mubr.f32.gmra.mrb[0].mxu0 %v82
  %v175 = vpop.f32.mrb[0].mxu0
  %v176 = vadd.f32 %v43, %v175
  %v177 = vpop.f32.mrb[0].mxu0
  %178 = vmatprep.mubr.f32.mxu0 0.0
  %179 = vmatmul.mubr.f32.gmra.mrb[0].mxu0 %v85
  %v180 = vpop.f32.mrb[0].mxu0
  %v181 = vadd.f32 %v48, %v180
  %v182 = vpop.f32.mrb[0].mxu0
  %183 = vmatprep.mubr.f32.mxu0 0.0
  %184 = vmatmul.mubr.f32.gmra.mrb[0].mxu0 %v88
  %v185 = vpop.f32.mrb[0].mxu0
  %v186 = vadd.f32 %v53, %v185
  %v187 = vpop.f32.mrb[0].mxu0
  %188 = vmatprep.mubr.f32.mxu0 0.0
  %189 = vmatmul.mubr.f32.gmra.mrb[0].mxu0 %v91
  %v190 = vpop.f32.mrb[0].mxu0
  %v191 = vadd.f32 %v58, %v190
  %v192 = vpop.f32.mrb[0].mxu0
  %193 = vmatprep.mubr.f32.mxu0 0.0
  %194 = vmatmul.mubr.f32.gmra.mrb[0].mxu0 %v94
  %v195 = vpop.f32.mrb[0].mxu0
  %v196 = vadd.f32 %v63, %v195
  %v197 = vpop.f32.mrb[0].mxu0
  %198 = vmatprep.mubr.f32.mxu0 0.0
  %199 = vmatmul.mubr.f32.gmra.mrb[0].mxu0 %v97
  %v200 = vpop.f32.mrb[0].mxu0
  %v201 = vadd.f32 %v68, %v200
  %v202 = vpop.f32.mrb[0].mxu0
  %203 = vmatprep.mubr.f32.mxu0 0.0
  %204 = vmatmul.mubr.f32.gmra.mrb[0].mxu0 %v100
  %v205 = vpop.f32.mrb[0].mxu0
  %v206 = vadd.f32 %v73, %v205
  %v207 = vpop.f32.mrb[0].mxu0
  %208 = vmatprep.mubr.f32.mxu0 0.0
  %209 = vmatmul.mubr.f32.gmra.mrb[0].mxu0 %v103
  %v210 = vpop.f32.mrb[0].mxu0
  %v211 = vadd.f32 %v78, %v210
  %v212 = vpop.f32.mrb[0].mxu0
  %213 = vdwg.mxu0
  %v214 = vmax.f32 %v176, 0.0
  %v215 = vmax.f32 %v181, 0.0
  %v216 = vmax.f32 %v186, 0.0
  %v217 = vmax.f32 %v191, 0.0
  %v218 = vmax.f32 %v196, 0.0
  %v219 = vmax.f32 %v201, 0.0
  %v220 = vmax.f32 %v206, 0.0
  %v221 = vmax.f32 %v211, 0.0
  %v222 = vld [vmem:[%s3] sm:$0xff]
  %v223 = vld [vmem:[%s3 + $0x8] sm:$0x1]
  %v224 = vld [vmem:[%s4] sm:$0xff]
  %v225 = vld [vmem:[%s4 + $0x8] sm:$0x1]
  %227 = vset.pattern.permute.xlu0 0
  %228 = vperm.xlu0 %227, %v224
  %v229 = vpop.permute.xlu0 %228
  %232 = vset.pattern.permute.xlu0 0
  %233 = vperm.xlu0 %232, %v225
  %v234 = vpop.permute.xlu0 %233
  %vm236 = vcmask 523264
  %v238 = vsel %vm236, %v222, 0
  %v241 = vsel %vm236, %v223, 0
  %243 = vmatprep.subr.mxu0 0.0
  %244 = vmatpush1.msra.mxu0 %v214
  %245 = vmatprep.subr.mxu0 0.0
  %246 = vmatpush1.msra.mxu0 %v215
  %247 = vmatprep.subr.mxu0 0.0
  %248 = vmatpush1.msra.mxu0 %v216
  %249 = vmatprep.subr.mxu0 0.0
  %250 = vmatpush1.msra.mxu0 %v217
  %251 = vmatprep.subr.mxu0 0.0
  %252 = vmatpush1.msra.mxu0 %v218
  %253 = vmatprep.subr.mxu0 0.0
  %254 = vmatpush1.msra.mxu0 %v219
  %255 = vmatprep.subr.mxu0 0.0
  %256 = vmatpush1.msra.mxu0 %v220
  %257 = vmatprep.subr.mxu0 0.0
  %258 = vmatpush1.msra.mxu0 %v221
  %259 = vmatprep.subr.mxu0 0.0
  %260 = vmatpush1.msra.mxu0 0.0
  %261 = vmatprep.subr.mxu0 0.0
  %262 = vmatpush1.msra.mxu0 0.0
  %263 = vmatprep.subr.mxu0 0.0
  %264 = vmatpush1.msra.mxu0 0.0
  %265 = vmatprep.subr.mxu0 0.0
  %266 = vmatpush1.msra.mxu0 0.0
  %267 = vmatprep.subr.mxu0 0.0
  %268 = vmatpush1.msra.mxu0 0.0
  %269 = vmatprep.subr.mxu0 0.0
  %270 = vmatpush1.msra.mxu0 0.0
  %271 = vmatprep.subr.mxu0 0.0
  %272 = vmatpush1.msra.mxu0 0.0
  %273 = vmatprep.subr.mxu0 0.0
  %274 = vmatpush1.msra.mxu0 0.0
  %275 = vmatprep.subr.mxu0 0.0
  %276 = vmatpush1.msra.mxu0 0.0
  %277 = vmatprep.subr.mxu0 0.0
  %278 = vmatpush1.msra.mxu0 0.0
  %279 = vmatprep.subr.mxu0 0.0
  %280 = vmatpush1.msra.mxu0 0.0
  %281 = vmatprep.subr.mxu0 0.0
  %282 = vmatpush1.msra.mxu0 0.0
  %283 = vmatprep.subr.mxu0 0.0
  %284 = vmatpush1.msra.mxu0 0.0
  %285 = vmatprep.subr.mxu0 0.0
  %286 = vmatpush1.msra.mxu0 0.0
  %287 = vmatprep.subr.mxu0 0.0
  %288 = vmatpush1.msra.mxu0 0.0
  %289 = vmatprep.subr.mxu0 0.0
  %290 = vmatpush1.msra.mxu0 0.0
  %291 = vmatprep.subr.mxu0 0.0
  %292 = vmatpush1.msra.mxu0 0.0
  %293 = vmatprep.subr.mxu0 0.0
  %294 = vmatpush1.msra.mxu0 0.0
  %295 = vmatprep.subr.mxu0 0.0
  %296 = vmatpush1.msra.mxu0 0.0
  %297 = vmatprep.subr.mxu0 0.0
  %298 = vmatpush1.msra.mxu0 0.0
  %299 = vmatprep.subr.mxu0 0.0
  %300 = vmatpush1.msra.mxu0 0.0
  %301 = vmatprep.subr.mxu0 0.0
  %302 = vmatpush1.msra.mxu0 0.0
  %303 = vmatprep.subr.mxu0 0.0
  %304 = vmatpush1.msra.mxu0 0.0
  %305 = vmatprep.subr.mxu0 0.0
  %306 = vmatpush1.msra.mxu0 0.0
  %307 = vmatprep.mubr.f32.mxu0 0.0
  %308 = vmatmul.mubr.f32.gmra.mrb[0].mxu0 %v238
  %v309 = vpop.f32.mrb[0].mxu0
  %v310 = vadd.f32 %v229, %v309
  %v311 = vpop.f32.mrb[0].mxu0
  %312 = vmatprep.mubr.f32.mxu0 0.0
  %313 = vmatmul.mubr.f32.gmra.mrb[0].mxu0 %v241
  %v314 = vpop.f32.mrb[0].mxu0
  %v315 = vadd.f32 %v234, %v314
  %v316 = vpop.f32.mrb[0].mxu0
  %317 = vdwg.mxu0
  %vm318 = vcmask 1040384
  %v319 = vsel %vm318, %v315, -inf
  %v320 = vmax.f32 %v310, %v319
  %v321 = vrot.slane %v320, 4
  %v322 = vmax.f32 %v320, %v321
  %v323 = vrot.slane %v322, 2
  %v324 = vmax.f32 %v322, %v323
  %v325 = vrot.slane %v324, 1
  %v326 = vmax.f32 %v324, %v325
  %v327 = vsub.f32 %v310, %v326
  %v328 = vsub.f32 %v315, %v326
  %v329 = vmul.f32 %v327, 1.442695
  %v330 = vpow.pop %v329
  %v331 = vmul.f32 %v328, 1.442695
  %v332 = vpow.pop %v331
  %v333 = vsel %vm318, %v332, 0.0
  %v334 = vadd.f32 %v330, %v333
  %v335 = vrot.slane %v334, 4
  %v336 = vadd.f32 %v334, %v335
  %v337 = vrot.slane %v336, 2
  %v338 = vadd.f32 %v336, %v337
  %v339 = vrot.slane %v338, 1
  %v340 = vadd.f32 %v338, %v339
  %v341 = vrcp.pop %v340
  %v342 = vmul.f32 %v330, %v341
  %v343 = vmul.f32 %v332, %v341
  %344 = vst [vmem:[%s5] sm:$0xff] %v342
  %345 = vst [vmem:[%s5 + $0x8] sm:$0x1] %v343
  // Predicated region
  $region22: #{policy_forward.1} parent=0 // pred_check
    _
  $region23: #{policy_forward.1} parent=0 // pred_check_branch
    %347 = sbr.rel (0) target = $region25
  $region24: #{policy_forward.1} parent=0 // pred_region
    _
  $region25: #{policy_forward.1} parent=0 // pred_fallthru
    _
  // Predicated region
  $region26: #{policy_forward.1} parent=0 // pred_check
    _
  $region27: #{policy_forward.1} parent=0 // pred_check_branch
    %349 = sbr.rel (0) target = $region29
  $region28: #{policy_forward.1} parent=0 // pred_region
    _
  $region29: #{policy_forward.1} parent=0 // pred_fallthru
    _

</llo_original>
